<compile_context>
chip_gen: v7x
topology: tpu7x:2x2x1
jax: 0.10.0
libtpu: 0.0.40
codegen_flags: <defaults>
</compile_context>

<pallas_src>
import functools

import jax
import jax.numpy as jnp
from jax.experimental import pallas as pl
from jax.experimental.pallas import tpu as pltpu

BN_EPS = 1e-5


def _round_up(n, m):
    return ((n + m - 1) // m) * m


def _mlp_kernel(x_ref,
                w1_ref, b1_ref,
                w2_ref, b2_ref,
                w3_ref, b3_ref,
                w4_ref, b4_ref,
                wo_ref, bo_ref,
                out_ref,
                *, compute_dtype):
    """All tensors are feature-major: x [F, TILE], w [out, in], b [out, 1].

    Weights arrive already cast to `compute_dtype`; biases stay f32 and are
    added to the f32 MXU accumulator.
    """

    def layer(h, w_ref, b_ref):
        z = jnp.dot(w_ref[...], h.astype(compute_dtype),
                    preferred_element_type=jnp.float32) + b_ref[...]
        return jnp.tanh(z)                      # f32, EUP

    h = x_ref[...]                              # [F, TILE] f32
    h = layer(h, w1_ref, b1_ref)                # [64, TILE]
    h = layer(h, w2_ref, b2_ref)
    h = layer(h, w3_ref, b3_ref)
    h = layer(h, w4_ref, b4_ref)

    logits = jnp.dot(wo_ref[...], h.astype(compute_dtype),
                     preferred_element_type=jnp.float32) + bo_ref[...]  # [1, TILE]
    # sigmoid(x) == 0.5 * (tanh(0.5 * x) + 1): single EUP op, lane-dense store.
    out_ref[...] = 0.5 * (jnp.tanh(0.5 * logits) + 1.0)


def fuse_and_transpose_params(params, eps=BN_EPS, compute_dtype=jnp.float32):
    """Fold eval-mode BN into the linear layers and transpose to [out, in].

    BN(z) = (z - mean) * gamma / sqrt(var + eps) + beta = z * s + t
    with  s = gamma * rsqrt(var + eps),  t = beta - mean * s.
    For z = h @ w + b:  BN(z) = h @ (w * s) + (b * s + t).
    Done once per parameter set (no per-call cost); weights are cast to the
    kernel compute dtype here so the kernel never re-casts them per tile.
    """
    s = params["gamma"] * jax.lax.rsqrt(params["var"] + eps)   # [1, 64]
    t = params["beta"] - params["mean"] * s                    # [1, 64]

    def fuse(w, b):
        return w * s, b * s + t

    w1, b1 = fuse(params["w1"], params["b1"])
    w2, b2 = fuse(params["w2"], params["b2"])
    w3, b3 = fuse(params["w3"], params["b3"])
    w4, b4 = fuse(params["w4"], params["b4"])
    wo, bo = params["wo"], params["bo"]     # output layer: no BN

    def wt(w):   # weights -> [out, in], compute dtype
        return w.T.astype(compute_dtype)

    def bt(b):   # biases  -> [out, 1], f32 (added to f32 accumulator)
        return b.T.astype(jnp.float32)

    return dict(
        wt1=wt(w1), bt1=bt(b1), wt2=wt(w2), bt2=bt(b2),
        wt3=wt(w3), bt3=bt(b3), wt4=wt(w4), bt4=bt(b4),
        wto=wt(wo), bto=bt(bo),
    )


@functools.partial(jax.jit, static_argnames=("tile", "compute_dtype"))
def mlp_forward(x, fused, *, tile=2048, compute_dtype=jnp.float32):
    """x: [N, input_size] float32 -> [N, 1] float32."""
    n, f = x.shape

    # Lane axis must be a multiple of 128; keep the tile small for tiny N.
    tile = min(tile, _round_up(max(n, 1), 128))
    n_pad = _round_up(max(n, 1), tile)
    num_tiles = n_pad // tile

    # Feature-major, zero-padded input slab: [F, n_pad].
    x_t = jnp.zeros((f, n_pad), jnp.float32).at[:, :n].set(
        x.T.astype(jnp.float32))

    weight_args = (
        fused["wt1"], fused["bt1"],
        fused["wt2"], fused["bt2"],
        fused["wt3"], fused["bt3"],
        fused["wt4"], fused["bt4"],
        fused["wto"], fused["bto"],
    )

    def resident_spec(a):
        # Full-array block with a constant index_map: loaded into VMEM once,
        # never re-DMAed across grid steps.
        return pl.BlockSpec(a.shape, lambda i: (0, 0))

    out = pl.pallas_call(
        functools.partial(_mlp_kernel, compute_dtype=compute_dtype),
        out_shape=jax.ShapeDtypeStruct((1, n_pad), jnp.float32),
        grid=(num_tiles,),
        in_specs=[pl.BlockSpec((f, tile), lambda i: (0, i))]
                 + [resident_spec(a) for a in weight_args],
        out_specs=pl.BlockSpec((1, tile), lambda i: (0, i)),
        compiler_params=pltpu.CompilerParams(
            dimension_semantics=("parallel",)),
    )(x_t, *weight_args)

    return out[0, :n].reshape(n, 1)


def init_params(key, input_size=4, hidden=64):
    keys = jax.random.split(key, 12)

    def linear(kw, kb, fan_in, fan_out):
        bound = 1.0 / jnp.sqrt(fan_in)
        w = jax.random.uniform(kw, (fan_in, fan_out), jnp.float32, -bound, bound)
        b = jax.random.uniform(kb, (1, fan_out), jnp.float32, -bound, bound)
        return w, b

    w1, b1 = linear(keys[0], keys[1], input_size, hidden)
    w2, b2 = linear(keys[2], keys[3], hidden, hidden)
    w3, b3 = linear(keys[4], keys[5], hidden, hidden)
    w4, b4 = linear(keys[6], keys[7], hidden, hidden)
    wo, bo = linear(keys[8], keys[9], hidden, 1)

    # Shared BatchNorm1d(64) parameters + running stats (eval mode), perturbed
    # from the PyTorch defaults so the normalization is non-trivial.
    gamma = 1.0 + 0.1 * jax.random.normal(keys[10], (1, hidden), jnp.float32)
    beta = 0.1 * jax.random.normal(keys[11], (1, hidden), jnp.float32)
    mean = 0.05 * jnp.arange(hidden, dtype=jnp.float32).reshape(1, hidden) / hidden
    var = 1.0 + 0.01 * jnp.arange(hidden, dtype=jnp.float32).reshape(1, hidden) / hidden

    return dict(w1=w1, b1=b1, w2=w2, b2=b2, w3=w3, b3=b3, w4=w4, b4=b4,
                wo=wo, bo=bo, gamma=gamma, beta=beta, mean=mean, var=var)


def mlp_reference(x, p):
    """Pure-JAX reference of the same forward pass (unfused, batch-major)."""
    def bn(h):
        return (h - p["mean"]) * jax.lax.rsqrt(p["var"] + BN_EPS) * p["gamma"] + p["beta"]

    h = jnp.tanh(bn(x @ p["w1"] + p["b1"]))
    h = jnp.tanh(bn(h @ p["w2"] + p["b2"]))
    h = jnp.tanh(bn(h @ p["w3"] + p["b3"]))
    h = jnp.tanh(bn(h @ p["w4"] + p["b4"]))
    return jax.nn.sigmoid(h @ p["wo"] + p["bo"])


if __name__ == "__main__":
    key = jax.random.PRNGKey(0)
    k_x, k_x2, k_p = jax.random.split(key, 3)

    batch, input_size = 8, 4
    params = init_params(k_p, input_size=input_size, hidden=64)
    fused = fuse_and_transpose_params(params)

    # Small batch (single grid step, padded to one 128-lane tile).
    x = jax.random.normal(k_x, (batch, input_size), jnp.float32)
    out = jax.block_until_ready(mlp_forward(x, fused))
    ref = mlp_reference(x, params)
    assert out.shape == (batch, 1)
    assert jnp.allclose(out, ref, atol=5e-5, rtol=1e-4), (out, ref)

    # Larger batch exercising the multi-step grid + padding path.
    batch2 = 300
    x2 = jax.random.normal(k_x2, (batch2, input_size), jnp.float32)
    out2 = jax.block_until_ready(mlp_forward(x2, fused, tile=128))
    ref2 = mlp_reference(x2, params)
    assert out2.shape == (batch2, 1)
    assert jnp.allclose(out2, ref2, atol=5e-5, rtol=1e-4), (out2, ref2)

    print("KERNEL_OK")
</pallas_src>

<mosaic_0001>
module attributes {stable_mosaic.version = 11 : i64} {
  func.func @_mlp_kernel(%arg0: i32, %arg1: memref<4x128xf32, #tpu.memory_space<vmem>>, %arg2: memref<64x4xf32, #tpu.memory_space<vmem>>, %arg3: memref<64x1xf32, #tpu.memory_space<vmem>>, %arg4: memref<64x64xf32, #tpu.memory_space<vmem>>, %arg5: memref<64x1xf32, #tpu.memory_space<vmem>>, %arg6: memref<64x64xf32, #tpu.memory_space<vmem>>, %arg7: memref<64x1xf32, #tpu.memory_space<vmem>>, %arg8: memref<64x64xf32, #tpu.memory_space<vmem>>, %arg9: memref<64x1xf32, #tpu.memory_space<vmem>>, %arg10: memref<1x64xf32, #tpu.memory_space<vmem>>, %arg11: memref<1x1xf32, #tpu.memory_space<vmem>>, %arg12: memref<1x128xf32, #tpu.memory_space<vmem>>) attributes {dimension_semantics = [#tpu.dimension_semantics<parallel>], iteration_bounds = array<i64: 1>, scalar_prefetch = 0 : i64, scratch_operands = 0 : i64, tpu.core_type = #tpu.core_type<tc>, window_params = [{transform_indices = @transform_0, window_bounds = array<i64: 4, 128>}, {pipeline_mode = #tpu.pipeline_mode<synchronous>, transform_indices = @transform_1, window_bounds = array<i64: 64, 4>}, {pipeline_mode = #tpu.pipeline_mode<synchronous>, transform_indices = @transform_2, window_bounds = array<i64: 64, 1>}, {pipeline_mode = #tpu.pipeline_mode<synchronous>, transform_indices = @transform_3, window_bounds = array<i64: 64, 64>}, {pipeline_mode = #tpu.pipeline_mode<synchronous>, transform_indices = @transform_4, window_bounds = array<i64: 64, 1>}, {pipeline_mode = #tpu.pipeline_mode<synchronous>, transform_indices = @transform_5, window_bounds = array<i64: 64, 64>}, {pipeline_mode = #tpu.pipeline_mode<synchronous>, transform_indices = @transform_6, window_bounds = array<i64: 64, 1>}, {pipeline_mode = #tpu.pipeline_mode<synchronous>, transform_indices = @transform_7, window_bounds = array<i64: 64, 64>}, {pipeline_mode = #tpu.pipeline_mode<synchronous>, transform_indices = @transform_8, window_bounds = array<i64: 64, 1>}, {pipeline_mode = #tpu.pipeline_mode<synchronous>, transform_indices = @transform_9, window_bounds = array<i64: 1, 64>}, {pipeline_mode = #tpu.pipeline_mode<synchronous>, transform_indices = @transform_10, window_bounds = array<i64: 1, 1>}, {transform_indices = @transform_11, window_bounds = array<i64: 1, 128>}]} {
    %c0 = arith.constant 0 : index
    %c0_0 = arith.constant 0 : index
    %0 = vector.load %arg1[%c0, %c0_0] : memref<4x128xf32, #tpu.memory_space<vmem>>, vector<4x128xf32>
    %c0_1 = arith.constant 0 : index
    %c0_2 = arith.constant 0 : index
    %1 = vector.load %arg2[%c0_1, %c0_2] : memref<64x4xf32, #tpu.memory_space<vmem>>, vector<64x4xf32>
    %cst = arith.constant dense<0.000000e+00> : vector<64x128xf32>
    %2 = tpu.matmul %1, %0, %cst {dimension_numbers = #tpu.dot_dimension_numbers<[1], [0], [0], [1], [0, 0, 1, 1], [], []>} : vector<64x4xf32>, vector<4x128xf32>, vector<64x128xf32> -> vector<64x128xf32>
    %c0_3 = arith.constant 0 : index
    %c0_4 = arith.constant 0 : index
    %3 = vector.load %arg3[%c0_3, %c0_4] : memref<64x1xf32, #tpu.memory_space<vmem>>, vector<64x1xf32>
    %4 = vector.broadcast %3 : vector<64x1xf32> to vector<64x128xf32>
    %5 = arith.addf %2, %4 : vector<64x128xf32>
    %6 = math.tanh %5 : vector<64x128xf32>
    %c0_5 = arith.constant 0 : index
    %c0_6 = arith.constant 0 : index
    %7 = vector.load %arg4[%c0_5, %c0_6] : memref<64x64xf32, #tpu.memory_space<vmem>>, vector<64x64xf32>
    %cst_7 = arith.constant dense<0.000000e+00> : vector<64x128xf32>
    %8 = tpu.matmul %7, %6, %cst_7 {dimension_numbers = #tpu.dot_dimension_numbers<[1], [0], [0], [1], [0, 0, 1, 1], [], []>} : vector<64x64xf32>, vector<64x128xf32>, vector<64x128xf32> -> vector<64x128xf32>
    %c0_8 = arith.constant 0 : index
    %c0_9 = arith.constant 0 : index
    %9 = vector.load %arg5[%c0_8, %c0_9] : memref<64x1xf32, #tpu.memory_space<vmem>>, vector<64x1xf32>
    %10 = vector.broadcast %9 : vector<64x1xf32> to vector<64x128xf32>
    %11 = arith.addf %8, %10 : vector<64x128xf32>
    %12 = math.tanh %11 : vector<64x128xf32>
    %c0_10 = arith.constant 0 : index
    %c0_11 = arith.constant 0 : index
    %13 = vector.load %arg6[%c0_10, %c0_11] : memref<64x64xf32, #tpu.memory_space<vmem>>, vector<64x64xf32>
    %cst_12 = arith.constant dense<0.000000e+00> : vector<64x128xf32>
    %14 = tpu.matmul %13, %12, %cst_12 {dimension_numbers = #tpu.dot_dimension_numbers<[1], [0], [0], [1], [0, 0, 1, 1], [], []>} : vector<64x64xf32>, vector<64x128xf32>, vector<64x128xf32> -> vector<64x128xf32>
    %c0_13 = arith.constant 0 : index
    %c0_14 = arith.constant 0 : index
    %15 = vector.load %arg7[%c0_13, %c0_14] : memref<64x1xf32, #tpu.memory_space<vmem>>, vector<64x1xf32>
    %16 = vector.broadcast %15 : vector<64x1xf32> to vector<64x128xf32>
    %17 = arith.addf %14, %16 : vector<64x128xf32>
    %18 = math.tanh %17 : vector<64x128xf32>
    %c0_15 = arith.constant 0 : index
    %c0_16 = arith.constant 0 : index
    %19 = vector.load %arg8[%c0_15, %c0_16] : memref<64x64xf32, #tpu.memory_space<vmem>>, vector<64x64xf32>
    %cst_17 = arith.constant dense<0.000000e+00> : vector<64x128xf32>
    %20 = tpu.matmul %19, %18, %cst_17 {dimension_numbers = #tpu.dot_dimension_numbers<[1], [0], [0], [1], [0, 0, 1, 1], [], []>} : vector<64x64xf32>, vector<64x128xf32>, vector<64x128xf32> -> vector<64x128xf32>
    %c0_18 = arith.constant 0 : index
    %c0_19 = arith.constant 0 : index
    %21 = vector.load %arg9[%c0_18, %c0_19] : memref<64x1xf32, #tpu.memory_space<vmem>>, vector<64x1xf32>
    %22 = vector.broadcast %21 : vector<64x1xf32> to vector<64x128xf32>
    %23 = arith.addf %20, %22 : vector<64x128xf32>
    %24 = math.tanh %23 : vector<64x128xf32>
    %c0_20 = arith.constant 0 : index
    %c0_21 = arith.constant 0 : index
    %25 = vector.load %arg10[%c0_20, %c0_21] : memref<1x64xf32, #tpu.memory_space<vmem>>, vector<1x64xf32>
    %cst_22 = arith.constant dense<0.000000e+00> : vector<1x128xf32>
    %26 = tpu.matmul %25, %24, %cst_22 {dimension_numbers = #tpu.dot_dimension_numbers<[1], [0], [0], [1], [0, 0, 1, 1], [], []>} : vector<1x64xf32>, vector<64x128xf32>, vector<1x128xf32> -> vector<1x128xf32>
    %c0_23 = arith.constant 0 : index
    %c0_24 = arith.constant 0 : index
    %27 = vector.load %arg11[%c0_23, %c0_24] : memref<1x1xf32, #tpu.memory_space<vmem>>, vector<1x1xf32>
    %28 = vector.broadcast %27 : vector<1x1xf32> to vector<1x128xf32>
    %29 = arith.addf %26, %28 : vector<1x128xf32>
    %cst_25 = arith.constant 5.000000e-01 : f32
    %30 = vector.broadcast %cst_25 : f32 to vector<1x128xf32>
    %31 = arith.mulf %30, %29 : vector<1x128xf32>
    %32 = math.tanh %31 : vector<1x128xf32>
    %cst_26 = arith.constant 1.000000e+00 : f32
    %33 = vector.broadcast %cst_26 : f32 to vector<1x128xf32>
    %34 = arith.addf %32, %33 : vector<1x128xf32>
    %cst_27 = arith.constant 5.000000e-01 : f32
    %35 = vector.broadcast %cst_27 : f32 to vector<1x128xf32>
    %36 = arith.mulf %35, %34 : vector<1x128xf32>
    %c0_28 = arith.constant 0 : index
    %c0_29 = arith.constant 0 : index
    %37 = vector.load %arg12[%c0_28, %c0_29] : memref<1x128xf32, #tpu.memory_space<vmem>>, vector<1x128xf32>
    tpu.vector_store %arg12[%c0_28, %c0_29], %36 {strides = array<i32>} : memref<1x128xf32, #tpu.memory_space<vmem>>, vector<1x128xf32>,
    return
  }
  func.func @transform_0(%arg0: i32) -> (i32, i32) {
    %c0_i32 = arith.constant 0 : i32
    %c0_i32_0 = arith.constant 0 : i32
    return %c0_i32, %arg0 : i32, i32
  }
  func.func @transform_1(%arg0: i32) -> (i32, i32) {
    %c0_i32 = arith.constant 0 : i32
    %c0_i32_0 = arith.constant 0 : i32
    %c0_i32_1 = arith.constant 0 : i32
    return %c0_i32, %c0_i32_0 : i32, i32
  }
  func.func @transform_2(%arg0: i32) -> (i32, i32) {
    %c0_i32 = arith.constant 0 : i32
    %c0_i32_0 = arith.constant 0 : i32
    %c0_i32_1 = arith.constant 0 : i32
    return %c0_i32, %c0_i32_0 : i32, i32
  }
  func.func @transform_3(%arg0: i32) -> (i32, i32) {
    %c0_i32 = arith.constant 0 : i32
    %c0_i32_0 = arith.constant 0 : i32
    %c0_i32_1 = arith.constant 0 : i32
    return %c0_i32, %c0_i32_0 : i32, i32
  }
  func.func @transform_4(%arg0: i32) -> (i32, i32) {
    %c0_i32 = arith.constant 0 : i32
    %c0_i32_0 = arith.constant 0 : i32
    %c0_i32_1 = arith.constant 0 : i32
    return %c0_i32, %c0_i32_0 : i32, i32
  }
  func.func @transform_5(%arg0: i32) -> (i32, i32) {
    %c0_i32 = arith.constant 0 : i32
    %c0_i32_0 = arith.constant 0 : i32
    %c0_i32_1 = arith.constant 0 : i32
    return %c0_i32, %c0_i32_0 : i32, i32
  }
  func.func @transform_6(%arg0: i32) -> (i32, i32) {
    %c0_i32 = arith.constant 0 : i32
    %c0_i32_0 = arith.constant 0 : i32
    %c0_i32_1 = arith.constant 0 : i32
    return %c0_i32, %c0_i32_0 : i32, i32
  }
  func.func @transform_7(%arg0: i32) -> (i32, i32) {
    %c0_i32 = arith.constant 0 : i32
    %c0_i32_0 = arith.constant 0 : i32
    %c0_i32_1 = arith.constant 0 : i32
    return %c0_i32, %c0_i32_0 : i32, i32
  }
  func.func @transform_8(%arg0: i32) -> (i32, i32) {
    %c0_i32 = arith.constant 0 : i32
    %c0_i32_0 = arith.constant 0 : i32
    %c0_i32_1 = arith.constant 0 : i32
    return %c0_i32, %c0_i32_0 : i32, i32
  }
  func.func @transform_9(%arg0: i32) -> (i32, i32) {
    %c0_i32 = arith.constant 0 : i32
    %c0_i32_0 = arith.constant 0 : i32
    %c0_i32_1 = arith.constant 0 : i32
    return %c0_i32, %c0_i32_0 : i32, i32
  }
  func.func @transform_10(%arg0: i32) -> (i32, i32) {
    %c0_i32 = arith.constant 0 : i32
    %c0_i32_0 = arith.constant 0 : i32
    %c0_i32_1 = arith.constant 0 : i32
    return %c0_i32, %c0_i32_0 : i32, i32
  }
  func.func @transform_11(%arg0: i32) -> (i32, i32) {
    %c0_i32 = arith.constant 0 : i32
    %c0_i32_0 = arith.constant 0 : i32
    return %c0_i32, %arg0 : i32, i32
  }
}

</mosaic_0001>

<llo_original>
// kernel: mlp_forward.1
$region0: #{mlp_forward.1}
  #allocation0 [shape = 'u32[]', space=smem, size = 0x4, offset = 0x4, fixed_abs, tag = 'smem constant byte address 0x4 - core index']
  #allocation1 [shape = 'u32[144,128]{1,0:T(1,128)}', space=vmem, size = 0x12000, scoped, tag = 'internal scratch']
  #allocation2 [shape = 'f32[1,1]{1,0:T(1,128)S(1)}', space=vmem, size = 0x200, scoped, tag = 'scoped memory for mlp_forward.1']
  %s0 = inlined_call_operand.vmem [shape: f32[4,128], index: 0, kind: input, shape index: {}]
  %s1 = inlined_call_operand.vmem [shape: f32[64,4], index: 1, kind: input, shape index: {}]
  %s2 = inlined_call_operand.vmem [shape: f32[64,1], index: 2, kind: input, shape index: {}]
  %s3 = inlined_call_operand.vmem [shape: f32[64,64], index: 3, kind: input, shape index: {}]
  %s4 = inlined_call_operand.vmem [shape: f32[64,1], index: 4, kind: input, shape index: {}]
  %s5 = inlined_call_operand.vmem [shape: f32[64,64], index: 5, kind: input, shape index: {}]
  %s6 = inlined_call_operand.vmem [shape: f32[64,1], index: 6, kind: input, shape index: {}]
  %s7 = inlined_call_operand.vmem [shape: f32[64,64], index: 7, kind: input, shape index: {}]
  %s8 = inlined_call_operand.vmem [shape: f32[64,1], index: 8, kind: input, shape index: {}]
  %s9 = inlined_call_operand.vmem [shape: f32[1,64], index: 9, kind: input, shape index: {}]
  %s10 = inlined_call_operand.<no memory space> [shape: f32[1,1], index: 10, kind: input, shape index: {}]
  %s11 = inlined_call_operand.vmem [shape: f32[1,128], index: 11, kind: output, shape index: {}]
  %s12 = sld [smem:[#allocation0]]
  $region54: #{mlp_forward.1} parent=0
    _
  %s14 = ssub.s32 1, %s12
  %s15 = scalar_select 0, %s14, %s12
  %v16 = vstv %s10
  %17 = vst [vmem:[#allocation2] sm:$0x1] %v16
  // Predicated region
  $region2: #{mlp_forward.1} parent=0 // pred_check
    _
  $region3: #{mlp_forward.1} parent=0 // pred_check_branch
    %19 = sbr.rel (0) target = $region5
  $region4: #{mlp_forward.1} parent=0 // pred_region
    _
  $region5: #{mlp_forward.1} parent=0 // pred_fallthru
    _
  // Predicated region
  $region6: #{mlp_forward.1} parent=0 // pred_check
    _
  $region7: #{mlp_forward.1} parent=0 // pred_check_branch
    %21 = sbr.rel (0) target = $region9
  $region8: #{mlp_forward.1} parent=0 // pred_region
    _
  $region9: #{mlp_forward.1} parent=0 // pred_fallthru
    _
  // Predicated region
  $region10: #{mlp_forward.1} parent=0 // pred_check
    _
  $region11: #{mlp_forward.1} parent=0 // pred_check_branch
    %23 = sbr.rel (0) target = $region13
  $region12: #{mlp_forward.1} parent=0 // pred_region
    _
  $region13: #{mlp_forward.1} parent=0 // pred_fallthru
    _
  // Predicated region
  $region14: #{mlp_forward.1} parent=0 // pred_check
    _
  $region15: #{mlp_forward.1} parent=0 // pred_check_branch
    %25 = sbr.rel (0) target = $region17
  $region16: #{mlp_forward.1} parent=0 // pred_region
    _
  $region17: #{mlp_forward.1} parent=0 // pred_fallthru
    _
  // Predicated region
  $region18: #{mlp_forward.1} parent=0 // pred_check
    _
  $region19: #{mlp_forward.1} parent=0 // pred_check_branch
    %27 = sbr.rel (0) target = $region21
  $region20: #{mlp_forward.1} parent=0 // pred_region
    _
  $region21: #{mlp_forward.1} parent=0 // pred_fallthru
    _
  // Predicated region
  $region22: #{mlp_forward.1} parent=0 // pred_check
    _
  $region23: #{mlp_forward.1} parent=0 // pred_check_branch
    %29 = sbr.rel (0) target = $region25
  $region24: #{mlp_forward.1} parent=0 // pred_region
    _
  $region25: #{mlp_forward.1} parent=0 // pred_fallthru
    _
  // Predicated region
  $region26: #{mlp_forward.1} parent=0 // pred_check
    _
  $region27: #{mlp_forward.1} parent=0 // pred_check_branch
    %31 = sbr.rel (0) target = $region29
  $region28: #{mlp_forward.1} parent=0 // pred_region
    _
  $region29: #{mlp_forward.1} parent=0 // pred_fallthru
    _
  // Predicated region
  $region30: #{mlp_forward.1} parent=0 // pred_check
    _
  $region31: #{mlp_forward.1} parent=0 // pred_check_branch
    %33 = sbr.rel (0) target = $region33
  $region32: #{mlp_forward.1} parent=0 // pred_region
    _
  $region33: #{mlp_forward.1} parent=0 // pred_fallthru
    _
  // Predicated region
  $region34: #{mlp_forward.1} parent=0 // pred_check
    _
  $region35: #{mlp_forward.1} parent=0 // pred_check_branch
    %35 = sbr.rel (0) target = $region37
  $region36: #{mlp_forward.1} parent=0 // pred_region
    _
  $region37: #{mlp_forward.1} parent=0 // pred_fallthru
    _
  // Predicated region
  $region38: #{mlp_forward.1} parent=0 // pred_check
    _
  $region39: #{mlp_forward.1} parent=0 // pred_check_branch
    %37 = sbr.rel (0) target = $region41
  $region40: #{mlp_forward.1} parent=0 // pred_region
    _
  $region41: #{mlp_forward.1} parent=0 // pred_fallthru
    _
  // Predicated region
  $region42: #{mlp_forward.1} parent=0 // pred_check
    _
  $region43: #{mlp_forward.1} parent=0 // pred_check_branch
    %39 = sbr.rel (0) target = $region45
  $region44: #{mlp_forward.1} parent=0 // pred_region
    _
  $region45: #{mlp_forward.1} parent=0 // pred_fallthru
    _
  %v40 = vld [vmem:[%s0] sm:$0xf]
  %v41 = vld [vmem:[%s1] sm:$0xff]
  %v42 = vld [vmem:[%s1 + $0x8] sm:$0xff]
  %v43 = vld [vmem:[%s1 + $0x10] sm:$0xff]
  %v44 = vld [vmem:[%s1 + $0x18] sm:$0xff]
  %v45 = vld [vmem:[%s1 + $0x20] sm:$0xff]
  %v46 = vld [vmem:[%s1 + $0x28] sm:$0xff]
  %v47 = vld [vmem:[%s1 + $0x30] sm:$0xff]
  %v48 = vld [vmem:[%s1 + $0x38] sm:$0xff]
  %v49 = vld [vmem:[%s2] sm:$0xff]
  %v50 = vld [vmem:[%s2 + $0x8] sm:$0xff]
  %v51 = vld [vmem:[%s2 + $0x10] sm:$0xff]
  %v52 = vld [vmem:[%s2 + $0x18] sm:$0xff]
  %v53 = vld [vmem:[%s2 + $0x20] sm:$0xff]
  %v54 = vld [vmem:[%s2 + $0x28] sm:$0xff]
  %v55 = vld [vmem:[%s2 + $0x30] sm:$0xff]
  %v56 = vld [vmem:[%s2 + $0x38] sm:$0xff]
  %58 = vset.pattern.permute.xlu0 0
  %59 = vperm.xlu0 %58, %v49
  %v60 = vpop.permute.xlu0 %59
  %63 = vset.pattern.permute.xlu0 0
  %64 = vperm.xlu0 %63, %v50
  %v65 = vpop.permute.xlu0 %64
  %68 = vset.pattern.permute.xlu0 0
  %69 = vperm.xlu0 %68, %v51
  %v70 = vpop.permute.xlu0 %69
  %73 = vset.pattern.permute.xlu0 0
  %74 = vperm.xlu0 %73, %v52
  %v75 = vpop.permute.xlu0 %74
  %78 = vset.pattern.permute.xlu0 0
  %79 = vperm.xlu0 %78, %v53
  %v80 = vpop.permute.xlu0 %79
  %83 = vset.pattern.permute.xlu0 0
  %84 = vperm.xlu0 %83, %v54
  %v85 = vpop.permute.xlu0 %84
  %88 = vset.pattern.permute.xlu0 0
  %89 = vperm.xlu0 %88, %v55
  %v90 = vpop.permute.xlu0 %89
  %93 = vset.pattern.permute.xlu0 0
  %94 = vperm.xlu0 %93, %v56
  %v95 = vpop.permute.xlu0 %94
  %vm97 = vcmask 31744
  %v99 = vsel %vm97, %v41, 0
  %v102 = vsel %vm97, %v42, 0
  %v105 = vsel %vm97, %v43, 0
  %v108 = vsel %vm97, %v44, 0
  %v111 = vsel %vm97, %v45, 0
  %v114 = vsel %vm97, %v46, 0
  %v117 = vsel %vm97, %v47, 0
  %v120 = vsel %vm97, %v48, 0
  %vm122 = vcmask 1043456
  %v124 = vsel %vm122, %v40, 0
  %126 = vmatprep.subr.mxu0 0.0
  %127 = vmatpush1.msra.mxu0 %v124
  %128 = vmatprep.subr.mxu0 0.0
  %129 = vmatpush1.msra.mxu0 0.0
  %130 = vmatprep.subr.mxu0 0.0
  %131 = vmatpush1.msra.mxu0 0.0
  %132 = vmatprep.subr.mxu0 0.0
  %133 = vmatpush1.msra.mxu0 0.0
  %134 = vmatprep.subr.mxu0 0.0
  %135 = vmatpush1.msra.mxu0 0.0
  %136 = vmatprep.subr.mxu0 0.0
  %137 = vmatpush1.msra.mxu0 0.0
  %138 = vmatprep.subr.mxu0 0.0
  %139 = vmatpush1.msra.mxu0 0.0
  %140 = vmatprep.subr.mxu0 0.0
  %141 = vmatpush1.msra.mxu0 0.0
  %142 = vmatprep.subr.mxu0 0.0
  %143 = vmatpush1.msra.mxu0 0.0
  %144 = vmatprep.subr.mxu0 0.0
  %145 = vmatpush1.msra.mxu0 0.0
  %146 = vmatprep.subr.mxu0 0.0
  %147 = vmatpush1.msra.mxu0 0.0
  %148 = vmatprep.subr.mxu0 0.0
  %149 = vmatpush1.msra.mxu0 0.0
  %150 = vmatprep.subr.mxu0 0.0
  %151 = vmatpush1.msra.mxu0 0.0
  %152 = vmatprep.subr.mxu0 0.0
  %153 = vmatpush1.msra.mxu0 0.0
  %154 = vmatprep.subr.mxu0 0.0
  %155 = vmatpush1.msra.mxu0 0.0
  %156 = vmatprep.subr.mxu0 0.0
  %157 = vmatpush1.msra.mxu0 0.0
  %158 = vmatprep.subr.mxu0 0.0
  %159 = vmatpush1.msra.mxu0 0.0
  %160 = vmatprep.subr.mxu0 0.0
  %161 = vmatpush1.msra.mxu0 0.0
  %162 = vmatprep.subr.mxu0 0.0
  %163 = vmatpush1.msra.mxu0 0.0
  %164 = vmatprep.subr.mxu0 0.0
  %165 = vmatpush1.msra.mxu0 0.0
  %166 = vmatprep.subr.mxu0 0.0
  %167 = vmatpush1.msra.mxu0 0.0
  %168 = vmatprep.subr.mxu0 0.0
  %169 = vmatpush1.msra.mxu0 0.0
  %170 = vmatprep.subr.mxu0 0.0
  %171 = vmatpush1.msra.mxu0 0.0
  %172 = vmatprep.subr.mxu0 0.0
  %173 = vmatpush1.msra.mxu0 0.0
  %174 = vmatprep.subr.mxu0 0.0
  %175 = vmatpush1.msra.mxu0 0.0
  %176 = vmatprep.subr.mxu0 0.0
  %177 = vmatpush1.msra.mxu0 0.0
  %178 = vmatprep.subr.mxu0 0.0
  %179 = vmatpush1.msra.mxu0 0.0
  %180 = vmatprep.subr.mxu0 0.0
  %181 = vmatpush1.msra.mxu0 0.0
  %182 = vmatprep.subr.mxu0 0.0
  %183 = vmatpush1.msra.mxu0 0.0
  %184 = vmatprep.subr.mxu0 0.0
  %185 = vmatpush1.msra.mxu0 0.0
  %186 = vmatprep.subr.mxu0 0.0
  %187 = vmatpush1.msra.mxu0 0.0
  %188 = vmatprep.subr.mxu0 0.0
  %189 = vmatpush1.msra.mxu0 0.0
  %190 = vmatprep.mubr.f32.mxu0 0.0
  %191 = vmatmul.mubr.f32.gmra.mrb[0].mxu0 %v99
  %v192 = vpop.f32.mrb[0].mxu0
  %v193 = vadd.f32 %v60, %v192
  %v194 = vpop.f32.mrb[0].mxu0
  %195 = vmatprep.mubr.f32.mxu0 0.0
  %196 = vmatmul.mubr.f32.gmra.mrb[0].mxu0 %v102
  %v197 = vpop.f32.mrb[0].mxu0
  %v198 = vadd.f32 %v65, %v197
  %v199 = vpop.f32.mrb[0].mxu0
  %200 = vmatprep.mubr.f32.mxu0 0.0
  %201 = vmatmul.mubr.f32.gmra.mrb[0].mxu0 %v105
  %v202 = vpop.f32.mrb[0].mxu0
  %v203 = vadd.f32 %v70, %v202
  %v204 = vpop.f32.mrb[0].mxu0
  %205 = vmatprep.mubr.f32.mxu0 0.0
  %206 = vmatmul.mubr.f32.gmra.mrb[0].mxu0 %v108
  %v207 = vpop.f32.mrb[0].mxu0
  %v208 = vadd.f32 %v75, %v207
  %v209 = vpop.f32.mrb[0].mxu0
  %210 = vmatprep.mubr.f32.mxu0 0.0
  %211 = vmatmul.mubr.f32.gmra.mrb[0].mxu0 %v111
  %v212 = vpop.f32.mrb[0].mxu0
  %v213 = vadd.f32 %v80, %v212
  %v214 = vpop.f32.mrb[0].mxu0
  %215 = vmatprep.mubr.f32.mxu0 0.0
  %216 = vmatmul.mubr.f32.gmra.mrb[0].mxu0 %v114
  %v217 = vpop.f32.mrb[0].mxu0
  %v218 = vadd.f32 %v85, %v217
  %v219 = vpop.f32.mrb[0].mxu0
  %220 = vmatprep.mubr.f32.mxu0 0.0
  %221 = vmatmul.mubr.f32.gmra.mrb[0].mxu0 %v117
  %v222 = vpop.f32.mrb[0].mxu0
  %v223 = vadd.f32 %v90, %v222
  %v224 = vpop.f32.mrb[0].mxu0
  %225 = vmatprep.mubr.f32.mxu0 0.0
  %226 = vmatmul.mubr.f32.gmra.mrb[0].mxu0 %v120
  %v227 = vpop.f32.mrb[0].mxu0
  %v228 = vadd.f32 %v95, %v227
  %v229 = vpop.f32.mrb[0].mxu0
  %230 = vdwg.mxu0
  %v231 = vtanh.pop %v193
  %v232 = vtanh.pop %v198
  %v233 = vtanh.pop %v203
  %v234 = vtanh.pop %v208
  %v235 = vtanh.pop %v213
  %v236 = vtanh.pop %v218
  %v237 = vtanh.pop %v223
  %v238 = vtanh.pop %v228
  %v239 = vld [vmem:[%s3] sm:$0xff]
  %v240 = vld [vmem:[%s3 + $0x8] sm:$0xff]
  %v241 = vld [vmem:[%s3 + $0x10] sm:$0xff]
  %v242 = vld [vmem:[%s3 + $0x18] sm:$0xff]
  %v243 = vld [vmem:[%s3 + $0x20] sm:$0xff]
  %v244 = vld [vmem:[%s3 + $0x28] sm:$0xff]
  %v245 = vld [vmem:[%s3 + $0x30] sm:$0xff]
  %v246 = vld [vmem:[%s3 + $0x38] sm:$0xff]
  %v247 = vld [vmem:[%s4] sm:$0xff]
  %v248 = vld [vmem:[%s4 + $0x8] sm:$0xff]
  %v249 = vld [vmem:[%s4 + $0x10] sm:$0xff]
  %v250 = vld [vmem:[%s4 + $0x18] sm:$0xff]
  %v251 = vld [vmem:[%s4 + $0x20] sm:$0xff]
  %v252 = vld [vmem:[%s4 + $0x28] sm:$0xff]
  %v253 = vld [vmem:[%s4 + $0x30] sm:$0xff]
  %v254 = vld [vmem:[%s4 + $0x38] sm:$0xff]
  %256 = vset.pattern.permute.xlu0 0
  %257 = vperm.xlu0 %256, %v247
  %v258 = vpop.permute.xlu0 %257
  %261 = vset.pattern.permute.xlu0 0
  %262 = vperm.xlu0 %261, %v248
  %v263 = vpop.permute.xlu0 %262
  %266 = vset.pattern.permute.xlu0 0
  %267 = vperm.xlu0 %266, %v249
  %v268 = vpop.permute.xlu0 %267
  %271 = vset.pattern.permute.xlu0 0
  %272 = vperm.xlu0 %271, %v250
  %v273 = vpop.permute.xlu0 %272
  %276 = vset.pattern.permute.xlu0 0
  %277 = vperm.xlu0 %276, %v251
  %v278 = vpop.permute.xlu0 %277
  %281 = vset.pattern.permute.xlu0 0
  %282 = vperm.xlu0 %281, %v252
  %v283 = vpop.permute.xlu0 %282
  %286 = vset.pattern.permute.xlu0 0
  %287 = vperm.xlu0 %286, %v253
  %v288 = vpop.permute.xlu0 %287
  %291 = vset.pattern.permute.xlu0 0
  %292 = vperm.xlu0 %291, %v254
  %v293 = vpop.permute.xlu0 %292
  %vm295 = vcmask 523264
  %v297 = vsel %vm295, %v239, 0
  %v300 = vsel %vm295, %v240, 0
  %v303 = vsel %vm295, %v241, 0
  %v306 = vsel %vm295, %v242, 0
  %v309 = vsel %vm295, %v243, 0
  %v312 = vsel %vm295, %v244, 0
  %v315 = vsel %vm295, %v245, 0
  %v318 = vsel %vm295, %v246, 0
  %320 = vmatprep.subr.mxu0 0.0
  %321 = vmatpush1.msra.mxu0 %v231
  %322 = vmatprep.subr.mxu0 0.0
  %323 = vmatpush1.msra.mxu0 %v232
  %324 = vmatprep.subr.mxu0 0.0
  %325 = vmatpush1.msra.mxu0 %v233
  %326 = vmatprep.subr.mxu0 0.0
  %327 = vmatpush1.msra.mxu0 %v234
  %328 = vmatprep.subr.mxu0 0.0
  %329 = vmatpush1.msra.mxu0 %v235
  %330 = vmatprep.subr.mxu0 0.0
  %331 = vmatpush1.msra.mxu0 %v236
  %332 = vmatprep.subr.mxu0 0.0
  %333 = vmatpush1.msra.mxu0 %v237
  %334 = vmatprep.subr.mxu0 0.0
  %335 = vmatpush1.msra.mxu0 %v238
  %336 = vmatprep.subr.mxu0 0.0
  %337 = vmatpush1.msra.mxu0 0.0
  %338 = vmatprep.subr.mxu0 0.0
  %339 = vmatpush1.msra.mxu0 0.0
  %340 = vmatprep.subr.mxu0 0.0
  %341 = vmatpush1.msra.mxu0 0.0
  %342 = vmatprep.subr.mxu0 0.0
  %343 = vmatpush1.msra.mxu0 0.0
  %344 = vmatprep.subr.mxu0 0.0
  %345 = vmatpush1.msra.mxu0 0.0
  %346 = vmatprep.subr.mxu0 0.0
  %347 = vmatpush1.msra.mxu0 0.0
  %348 = vmatprep.subr.mxu0 0.0
  %349 = vmatpush1.msra.mxu0 0.0
  %350 = vmatprep.subr.mxu0 0.0
  %351 = vmatpush1.msra.mxu0 0.0
  %352 = vmatprep.subr.mxu0 0.0
  %353 = vmatpush1.msra.mxu0 0.0
  %354 = vmatprep.subr.mxu0 0.0
  %355 = vmatpush1.msra.mxu0 0.0
  %356 = vmatprep.subr.mxu0 0.0
  %357 = vmatpush1.msra.mxu0 0.0
  %358 = vmatprep.subr.mxu0 0.0
  %359 = vmatpush1.msra.mxu0 0.0
  %360 = vmatprep.subr.mxu0 0.0
  %361 = vmatpush1.msra.mxu0 0.0
  %362 = vmatprep.subr.mxu0 0.0
  %363 = vmatpush1.msra.mxu0 0.0
  %364 = vmatprep.subr.mxu0 0.0
  %365 = vmatpush1.msra.mxu0 0.0
  %366 = vmatprep.subr.mxu0 0.0
  %367 = vmatpush1.msra.mxu0 0.0
  %368 = vmatprep.subr.mxu0 0.0
  %369 = vmatpush1.msra.mxu0 0.0
  %370 = vmatprep.subr.mxu0 0.0
  %371 = vmatpush1.msra.mxu0 0.0
  %372 = vmatprep.subr.mxu0 0.0
  %373 = vmatpush1.msra.mxu0 0.0
  %374 = vmatprep.subr.mxu0 0.0
  %375 = vmatpush1.msra.mxu0 0.0
  %376 = vmatprep.subr.mxu0 0.0
  %377 = vmatpush1.msra.mxu0 0.0
  %378 = vmatprep.subr.mxu0 0.0
  %379 = vmatpush1.msra.mxu0 0.0
  %380 = vmatprep.subr.mxu0 0.0
  %381 = vmatpush1.msra.mxu0 0.0
  %382 = vmatprep.subr.mxu0 0.0
  %383 = vmatpush1.msra.mxu0 0.0
  %384 = vmatprep.mubr.f32.mxu0 0.0
  %385 = vmatmul.mubr.f32.gmra.mrb[0].mxu0 %v297
  %v386 = vpop.f32.mrb[0].mxu0
  %v387 = vadd.f32 %v258, %v386
  %v388 = vpop.f32.mrb[0].mxu0
  %389 = vmatprep.mubr.f32.mxu0 0.0
  %390 = vmatmul.mubr.f32.gmra.mrb[0].mxu0 %v300
  %v391 = vpop.f32.mrb[0].mxu0
  %v392 = vadd.f32 %v263, %v391
  %v393 = vpop.f32.mrb[0].mxu0
  %394 = vmatprep.mubr.f32.mxu0 0.0
  %395 = vmatmul.mubr.f32.gmra.mrb[0].mxu0 %v303
  %v396 = vpop.f32.mrb[0].mxu0
  %v397 = vadd.f32 %v268, %v396
  %v398 = vpop.f32.mrb[0].mxu0
  %399 = vmatprep.mubr.f32.mxu0 0.0
  %400 = vmatmul.mubr.f32.gmra.mrb[0].mxu0 %v306
  %v401 = vpop.f32.mrb[0].mxu0
  %v402 = vadd.f32 %v273, %v401
  %v403 = vpop.f32.mrb[0].mxu0
  %404 = vmatprep.mubr.f32.mxu0 0.0
  %405 = vmatmul.mubr.f32.gmra.mrb[0].mxu0 %v309
  %v406 = vpop.f32.mrb[0].mxu0
  %v407 = vadd.f32 %v278, %v406
  %v408 = vpop.f32.mrb[0].mxu0
  %409 = vmatprep.mubr.f32.mxu0 0.0
  %410 = vmatmul.mubr.f32.gmra.mrb[0].mxu0 %v312
  %v411 = vpop.f32.mrb[0].mxu0
  %v412 = vadd.f32 %v283, %v411
  %v413 = vpop.f32.mrb[0].mxu0
  %414 = vmatprep.mubr.f32.mxu0 0.0
  %415 = vmatmul.mubr.f32.gmra.mrb[0].mxu0 %v315
  %v416 = vpop.f32.mrb[0].mxu0
  %v417 = vadd.f32 %v288, %v416
  %v418 = vpop.f32.mrb[0].mxu0
  %419 = vmatprep.mubr.f32.mxu0 0.0
  %420 = vmatmul.mubr.f32.gmra.mrb[0].mxu0 %v318
  %v421 = vpop.f32.mrb[0].mxu0
  %v422 = vadd.f32 %v293, %v421
  %v423 = vpop.f32.mrb[0].mxu0
  %424 = vdwg.mxu0
  %v425 = vtanh.pop %v387
  %v426 = vtanh.pop %v392
  %v427 = vtanh.pop %v397
  %v428 = vtanh.pop %v402
  %v429 = vtanh.pop %v407
  %v430 = vtanh.pop %v412
  %v431 = vtanh.pop %v417
  %v432 = vtanh.pop %v422
  %v433 = vld [vmem:[%s5] sm:$0xff]
  %v434 = vld [vmem:[%s5 + $0x8] sm:$0xff]
  %v435 = vld [vmem:[%s5 + $0x10] sm:$0xff]
  %v436 = vld [vmem:[%s5 + $0x18] sm:$0xff]
  %v437 = vld [vmem:[%s5 + $0x20] sm:$0xff]
  %v438 = vld [vmem:[%s5 + $0x28] sm:$0xff]
  %v439 = vld [vmem:[%s5 + $0x30] sm:$0xff]
  %v440 = vld [vmem:[%s5 + $0x38] sm:$0xff]
  %v441 = vld [vmem:[%s6] sm:$0xff]
  %v442 = vld [vmem:[%s6 + $0x8] sm:$0xff]
  %v443 = vld [vmem:[%s6 + $0x10] sm:$0xff]
  %v444 = vld [vmem:[%s6 + $0x18] sm:$0xff]
  %v445 = vld [vmem:[%s6 + $0x20] sm:$0xff]
  %v446 = vld [vmem:[%s6 + $0x28] sm:$0xff]
  %v447 = vld [vmem:[%s6 + $0x30] sm:$0xff]
  %v448 = vld [vmem:[%s6 + $0x38] sm:$0xff]
  %450 = vset.pattern.permute.xlu0 0
  %451 = vperm.xlu0 %450, %v441
  %v452 = vpop.permute.xlu0 %451
  %455 = vset.pattern.permute.xlu0 0
  %456 = vperm.xlu0 %455, %v442
  %v457 = vpop.permute.xlu0 %456
  %460 = vset.pattern.permute.xlu0 0
  %461 = vperm.xlu0 %460, %v443
  %v462 = vpop.permute.xlu0 %461
  %465 = vset.pattern.permute.xlu0 0
  %466 = vperm.xlu0 %465, %v444
  %v467 = vpop.permute.xlu0 %466
  %470 = vset.pattern.permute.xlu0 0
  %471 = vperm.xlu0 %470, %v445
  %v472 = vpop.permute.xlu0 %471
  %475 = vset.pattern.permute.xlu0 0
  %476 = vperm.xlu0 %475, %v446
  %v477 = vpop.permute.xlu0 %476
  %480 = vset.pattern.permute.xlu0 0
  %481 = vperm.xlu0 %480, %v447
  %v482 = vpop.permute.xlu0 %481
  %485 = vset.pattern.permute.xlu0 0
  %486 = vperm.xlu0 %485, %v448
  %v487 = vpop.permute.xlu0 %486
  %v490 = vsel %vm295, %v433, 0
  %v493 = vsel %vm295, %v434, 0
  %v496 = vsel %vm295, %v435, 0
  %v499 = vsel %vm295, %v436, 0
  %v502 = vsel %vm295, %v437, 0
  %v505 = vsel %vm295, %v438, 0
  %v508 = vsel %vm295, %v439, 0
  %v511 = vsel %vm295, %v440, 0
  %513 = vmatprep.subr.mxu0 0.0
  %514 = vmatpush1.msra.mxu0 %v425
  %515 = vmatprep.subr.mxu0 0.0
  %516 = vmatpush1.msra.mxu0 %v426
  %517 = vmatprep.subr.mxu0 0.0
  %518 = vmatpush1.msra.mxu0 %v427
  %519 = vmatprep.subr.mxu0 0.0
  %520 = vmatpush1.msra.mxu0 %v428
  %521 = vmatprep.subr.mxu0 0.0
  %522 = vmatpush1.msra.mxu0 %v429
  %523 = vmatprep.subr.mxu0 0.0
  %524 = vmatpush1.msra.mxu0 %v430
  %525 = vmatprep.subr.mxu0 0.0
  %526 = vmatpush1.msra.mxu0 %v431
  %527 = vmatprep.subr.mxu0 0.0
  %528 = vmatpush1.msra.mxu0 %v432
  %529 = vmatprep.subr.mxu0 0.0
  %530 = vmatpush1.msra.mxu0 0.0
  %531 = vmatprep.subr.mxu0 0.0
  %532 = vmatpush1.msra.mxu0 0.0
  %533 = vmatprep.subr.mxu0 0.0
  %534 = vmatpush1.msra.mxu0 0.0
  %535 = vmatprep.subr.mxu0 0.0
  %536 = vmatpush1.msra.mxu0 0.0
  %537 = vmatprep.subr.mxu0 0.0
  %538 = vmatpush1.msra.mxu0 0.0
  %539 = vmatprep.subr.mxu0 0.0
  %540 = vmatpush1.msra.mxu0 0.0
  %541 = vmatprep.subr.mxu0 0.0
  %542 = vmatpush1.msra.mxu0 0.0
  %543 = vmatprep.subr.mxu0 0.0
  %544 = vmatpush1.msra.mxu0 0.0
  %545 = vmatprep.subr.mxu0 0.0
  %546 = vmatpush1.msra.mxu0 0.0
  %547 = vmatprep.subr.mxu0 0.0
  %548 = vmatpush1.msra.mxu0 0.0
  %549 = vmatprep.subr.mxu0 0.0
  %550 = vmatpush1.msra.mxu0 0.0
  %551 = vmatprep.subr.mxu0 0.0
  %552 = vmatpush1.msra.mxu0 0.0
  %553 = vmatprep.subr.mxu0 0.0
  %554 = vmatpush1.msra.mxu0 0.0
  %555 = vmatprep.subr.mxu0 0.0
  %556 = vmatpush1.msra.mxu0 0.0
  %557 = vmatprep.subr.mxu0 0.0
  %558 = vmatpush1.msra.mxu0 0.0
  %559 = vmatprep.subr.mxu0 0.0
  %560 = vmatpush1.msra.mxu0 0.0
  %561 = vmatprep.subr.mxu0 0.0
  %562 = vmatpush1.msra.mxu0 0.0
  %563 = vmatprep.subr.mxu0 0.0
  %564 = vmatpush1.msra.mxu0 0.0
  %565 = vmatprep.subr.mxu0 0.0
  %566 = vmatpush1.msra.mxu0 0.0
  %567 = vmatprep.subr.mxu0 0.0
  %568 = vmatpush1.msra.mxu0 0.0
  %569 = vmatprep.subr.mxu0 0.0
  %570 = vmatpush1.msra.mxu0 0.0
  %571 = vmatprep.subr.mxu0 0.0
  %572 = vmatpush1.msra.mxu0 0.0
  %573 = vmatprep.subr.mxu0 0.0
  %574 = vmatpush1.msra.mxu0 0.0
  %575 = vmatprep.subr.mxu0 0.0
  %576 = vmatpush1.msra.mxu0 0.0
  %577 = vmatprep.mubr.f32.mxu0 0.0
  %578 = vmatmul.mubr.f32.gmra.mrb[0].mxu0 %v490
  %v579 = vpop.f32.mrb[0].mxu0
  %v580 = vadd.f32 %v452, %v579
  %v581 = vpop.f32.mrb[0].mxu0
  %582 = vmatprep.mubr.f32.mxu0 0.0
  %583 = vmatmul.mubr.f32.gmra.mrb[0].mxu0 %v493
  %v584 = vpop.f32.mrb[0].mxu0
  %v585 = vadd.f32 %v457, %v584
  %v586 = vpop.f32.mrb[0].mxu0
  %587 = vmatprep.mubr.f32.mxu0 0.0
  %588 = vmatmul.mubr.f32.gmra.mrb[0].mxu0 %v496
  %v589 = vpop.f32.mrb[0].mxu0
  %v590 = vadd.f32 %v462, %v589
  %v591 = vpop.f32.mrb[0].mxu0
  %592 = vmatprep.mubr.f32.mxu0 0.0
  %593 = vmatmul.mubr.f32.gmra.mrb[0].mxu0 %v499
  %v594 = vpop.f32.mrb[0].mxu0
  %v595 = vadd.f32 %v467, %v594
  %v596 = vpop.f32.mrb[0].mxu0
  %597 = vmatprep.mubr.f32.mxu0 0.0
  %598 = vmatmul.mubr.f32.gmra.mrb[0].mxu0 %v502
  %v599 = vpop.f32.mrb[0].mxu0
  %v600 = vadd.f32 %v472, %v599
  %v601 = vpop.f32.mrb[0].mxu0
  %602 = vmatprep.mubr.f32.mxu0 0.0
  %603 = vmatmul.mubr.f32.gmra.mrb[0].mxu0 %v505
  %v604 = vpop.f32.mrb[0].mxu0
  %v605 = vadd.f32 %v477, %v604
  %v606 = vpop.f32.mrb[0].mxu0
  %607 = vmatprep.mubr.f32.mxu0 0.0
  %608 = vmatmul.mubr.f32.gmra.mrb[0].mxu0 %v508
  %v609 = vpop.f32.mrb[0].mxu0
  %v610 = vadd.f32 %v482, %v609
  %v611 = vpop.f32.mrb[0].mxu0
  %612 = vmatprep.mubr.f32.mxu0 0.0
  %613 = vmatmul.mubr.f32.gmra.mrb[0].mxu0 %v511
  %v614 = vpop.f32.mrb[0].mxu0
  %v615 = vadd.f32 %v487, %v614
  %v616 = vpop.f32.mrb[0].mxu0
  %617 = vdwg.mxu0
  %v618 = vtanh.pop %v580
  %v619 = vtanh.pop %v585
  %v620 = vtanh.pop %v590
  %v621 = vtanh.pop %v595
  %v622 = vtanh.pop %v600
  %v623 = vtanh.pop %v605
  %v624 = vtanh.pop %v610
  %v625 = vtanh.pop %v615
  %v626 = vld [vmem:[%s7] sm:$0xff]
  %v627 = vld [vmem:[%s7 + $0x8] sm:$0xff]
  %v628 = vld [vmem:[%s7 + $0x10] sm:$0xff]
  %v629 = vld [vmem:[%s7 + $0x18] sm:$0xff]
  %v630 = vld [vmem:[%s7 + $0x20] sm:$0xff]
  %v631 = vld [vmem:[%s7 + $0x28] sm:$0xff]
  %v632 = vld [vmem:[%s7 + $0x30] sm:$0xff]
  %v633 = vld [vmem:[%s7 + $0x38] sm:$0xff]
  %v634 = vld [vmem:[%s8] sm:$0xff]
  %v635 = vld [vmem:[%s8 + $0x8] sm:$0xff]
  %v636 = vld [vmem:[%s8 + $0x10] sm:$0xff]
  %v637 = vld [vmem:[%s8 + $0x18] sm:$0xff]
  %v638 = vld [vmem:[%s8 + $0x20] sm:$0xff]
  %v639 = vld [vmem:[%s8 + $0x28] sm:$0xff]
  %v640 = vld [vmem:[%s8 + $0x30] sm:$0xff]
  %v641 = vld [vmem:[%s8 + $0x38] sm:$0xff]
  %643 = vset.pattern.permute.xlu0 0
  %644 = vperm.xlu0 %643, %v634
  %v645 = vpop.permute.xlu0 %644
  %648 = vset.pattern.permute.xlu0 0
  %649 = vperm.xlu0 %648, %v635
  %v650 = vpop.permute.xlu0 %649
  %653 = vset.pattern.permute.xlu0 0
  %654 = vperm.xlu0 %653, %v636
  %v655 = vpop.permute.xlu0 %654
  %658 = vset.pattern.permute.xlu0 0
  %659 = vperm.xlu0 %658, %v637
  %v660 = vpop.permute.xlu0 %659
  %663 = vset.pattern.permute.xlu0 0
  %664 = vperm.xlu0 %663, %v638
  %v665 = vpop.permute.xlu0 %664
  %668 = vset.pattern.permute.xlu0 0
  %669 = vperm.xlu0 %668, %v639
  %v670 = vpop.permute.xlu0 %669
  %673 = vset.pattern.permute.xlu0 0
  %674 = vperm.xlu0 %673, %v640
  %v675 = vpop.permute.xlu0 %674
  %678 = vset.pattern.permute.xlu0 0
  %679 = vperm.xlu0 %678, %v641
  %v680 = vpop.permute.xlu0 %679
  %v683 = vsel %vm295, %v626, 0
  %v686 = vsel %vm295, %v627, 0
  %v689 = vsel %vm295, %v628, 0
  %v692 = vsel %vm295, %v629, 0
  %v695 = vsel %vm295, %v630, 0
  %v698 = vsel %vm295, %v631, 0
  %v701 = vsel %vm295, %v632, 0
  %v704 = vsel %vm295, %v633, 0
  %706 = vmatprep.subr.mxu0 0.0
  %707 = vmatpush1.msra.mxu0 %v618
  %708 = vmatprep.subr.mxu0 0.0
  %709 = vmatpush1.msra.mxu0 %v619
  %710 = vmatprep.subr.mxu0 0.0
  %711 = vmatpush1.msra.mxu0 %v620
  %712 = vmatprep.subr.mxu0 0.0
  %713 = vmatpush1.msra.mxu0 %v621
  %714 = vmatprep.subr.mxu0 0.0
  %715 = vmatpush1.msra.mxu0 %v622
  %716 = vmatprep.subr.mxu0 0.0
  %717 = vmatpush1.msra.mxu0 %v623
  %718 = vmatprep.subr.mxu0 0.0
  %719 = vmatpush1.msra.mxu0 %v624
  %720 = vmatprep.subr.mxu0 0.0
  %721 = vmatpush1.msra.mxu0 %v625
  %722 = vmatprep.subr.mxu0 0.0
  %723 = vmatpush1.msra.mxu0 0.0
  %724 = vmatprep.subr.mxu0 0.0
  %725 = vmatpush1.msra.mxu0 0.0
  %726 = vmatprep.subr.mxu0 0.0
  %727 = vmatpush1.msra.mxu0 0.0
  %728 = vmatprep.subr.mxu0 0.0
  %729 = vmatpush1.msra.mxu0 0.0
  %730 = vmatprep.subr.mxu0 0.0
  %731 = vmatpush1.msra.mxu0 0.0
  %732 = vmatprep.subr.mxu0 0.0
  %733 = vmatpush1.msra.mxu0 0.0
  %734 = vmatprep.subr.mxu0 0.0
  %735 = vmatpush1.msra.mxu0 0.0
  %736 = vmatprep.subr.mxu0 0.0
  %737 = vmatpush1.msra.mxu0 0.0
  %738 = vmatprep.subr.mxu0 0.0
  %739 = vmatpush1.msra.mxu0 0.0
  %740 = vmatprep.subr.mxu0 0.0
  %741 = vmatpush1.msra.mxu0 0.0
  %742 = vmatprep.subr.mxu0 0.0
  %743 = vmatpush1.msra.mxu0 0.0
  %744 = vmatprep.subr.mxu0 0.0
  %745 = vmatpush1.msra.mxu0 0.0
  %746 = vmatprep.subr.mxu0 0.0
  %747 = vmatpush1.msra.mxu0 0.0
  %748 = vmatprep.subr.mxu0 0.0
  %749 = vmatpush1.msra.mxu0 0.0
  %750 = vmatprep.subr.mxu0 0.0
  %751 = vmatpush1.msra.mxu0 0.0
  %752 = vmatprep.subr.mxu0 0.0
  %753 = vmatpush1.msra.mxu0 0.0
  %754 = vmatprep.subr.mxu0 0.0
  %755 = vmatpush1.msra.mxu0 0.0
  %756 = vmatprep.subr.mxu0 0.0
  %757 = vmatpush1.msra.mxu0 0.0
  %758 = vmatprep.subr.mxu0 0.0
  %759 = vmatpush1.msra.mxu0 0.0
  %760 = vmatprep.subr.mxu0 0.0
  %761 = vmatpush1.msra.mxu0 0.0
  %762 = vmatprep.subr.mxu0 0.0
  %763 = vmatpush1.msra.mxu0 0.0
  %764 = vmatprep.subr.mxu0 0.0
  %765 = vmatpush1.msra.mxu0 0.0
  %766 = vmatprep.subr.mxu0 0.0
  %767 = vmatpush1.msra.mxu0 0.0
  %768 = vmatprep.subr.mxu0 0.0
  %769 = vmatpush1.msra.mxu0 0.0
  %770 = vmatprep.mubr.f32.mxu0 0.0
  %771 = vmatmul.mubr.f32.gmra.mrb[0].mxu0 %v683
  %v772 = vpop.f32.mrb[0].mxu0
  %v773 = vadd.f32 %v645, %v772
  %v774 = vpop.f32.mrb[0].mxu0
  %775 = vmatprep.mubr.f32.mxu0 0.0
  %776 = vmatmul.mubr.f32.gmra.mrb[0].mxu0 %v686
  %v777 = vpop.f32.mrb[0].mxu0
  %v778 = vadd.f32 %v650, %v777
  %v779 = vpop.f32.mrb[0].mxu0
  %780 = vmatprep.mubr.f32.mxu0 0.0
  %781 = vmatmul.mubr.f32.gmra.mrb[0].mxu0 %v689
  %v782 = vpop.f32.mrb[0].mxu0
  %v783 = vadd.f32 %v655, %v782
  %v784 = vpop.f32.mrb[0].mxu0
  %785 = vmatprep.mubr.f32.mxu0 0.0
  %786 = vmatmul.mubr.f32.gmra.mrb[0].mxu0 %v692
  %v787 = vpop.f32.mrb[0].mxu0
  %v788 = vadd.f32 %v660, %v787
  %v789 = vpop.f32.mrb[0].mxu0
  %790 = vmatprep.mubr.f32.mxu0 0.0
  %791 = vmatmul.mubr.f32.gmra.mrb[0].mxu0 %v695
  %v792 = vpop.f32.mrb[0].mxu0
  %v793 = vadd.f32 %v665, %v792
  %v794 = vpop.f32.mrb[0].mxu0
  %795 = vmatprep.mubr.f32.mxu0 0.0
  %796 = vmatmul.mubr.f32.gmra.mrb[0].mxu0 %v698
  %v797 = vpop.f32.mrb[0].mxu0
  %v798 = vadd.f32 %v670, %v797
  %v799 = vpop.f32.mrb[0].mxu0
  %800 = vmatprep.mubr.f32.mxu0 0.0
  %801 = vmatmul.mubr.f32.gmra.mrb[0].mxu0 %v701
  %v802 = vpop.f32.mrb[0].mxu0
  %v803 = vadd.f32 %v675, %v802
  %v804 = vpop.f32.mrb[0].mxu0
  %805 = vmatprep.mubr.f32.mxu0 0.0
  %806 = vmatmul.mubr.f32.gmra.mrb[0].mxu0 %v704
  %v807 = vpop.f32.mrb[0].mxu0
  %v808 = vadd.f32 %v680, %v807
  %v809 = vpop.f32.mrb[0].mxu0
  %810 = vdwg.mxu0
  %v811 = vtanh.pop %v773
  %v812 = vtanh.pop %v778
  %v813 = vtanh.pop %v783
  %v814 = vtanh.pop %v788
  %v815 = vtanh.pop %v793
  %v816 = vtanh.pop %v798
  %v817 = vtanh.pop %v803
  %v818 = vtanh.pop %v808
  %v819 = vld [vmem:[%s9] sm:$0x1]
  %v820 = vld [vmem:[#allocation2] sm:$0x1]
  %822 = vset.pattern.permute.xlu0 0
  %823 = vperm.xlu0 %822, %v820
  %v824 = vpop.permute.xlu0 %823
  %v826 = vlaneseq
  %v827 = vshrl.u32 %v826, 7
  %v828 = vsub.s32 0, %v827
  %v829 = vrot.slane %v824, %v828
  %v831 = vsel %vm295, %v819, 0
  %833 = vmatprep.subr.mxu0 0.0
  %834 = vmatpush1.msra.mxu0 %v811
  %835 = vmatprep.subr.mxu0 0.0
  %836 = vmatpush1.msra.mxu0 %v812
  %837 = vmatprep.subr.mxu0 0.0
  %838 = vmatpush1.msra.mxu0 %v813
  %839 = vmatprep.subr.mxu0 0.0
  %840 = vmatpush1.msra.mxu0 %v814
  %841 = vmatprep.subr.mxu0 0.0
  %842 = vmatpush1.msra.mxu0 %v815
  %843 = vmatprep.subr.mxu0 0.0
  %844 = vmatpush1.msra.mxu0 %v816
  %845 = vmatprep.subr.mxu0 0.0
  %846 = vmatpush1.msra.mxu0 %v817
  %847 = vmatprep.subr.mxu0 0.0
  %848 = vmatpush1.msra.mxu0 %v818
  %849 = vmatprep.subr.mxu0 0.0
  %850 = vmatpush1.msra.mxu0 0.0
  %851 = vmatprep.subr.mxu0 0.0
  %852 = vmatpush1.msra.mxu0 0.0
  %853 = vmatprep.subr.mxu0 0.0
  %854 = vmatpush1.msra.mxu0 0.0
  %855 = vmatprep.subr.mxu0 0.0
  %856 = vmatpush1.msra.mxu0 0.0
  %857 = vmatprep.subr.mxu0 0.0
  %858 = vmatpush1.msra.mxu0 0.0
  %859 = vmatprep.subr.mxu0 0.0
  %860 = vmatpush1.msra.mxu0 0.0
  %861 = vmatprep.subr.mxu0 0.0
  %862 = vmatpush1.msra.mxu0 0.0
  %863 = vmatprep.subr.mxu0 0.0
  %864 = vmatpush1.msra.mxu0 0.0
  %865 = vmatprep.subr.mxu0 0.0
  %866 = vmatpush1.msra.mxu0 0.0
  %867 = vmatprep.subr.mxu0 0.0
  %868 = vmatpush1.msra.mxu0 0.0
  %869 = vmatprep.subr.mxu0 0.0
  %870 = vmatpush1.msra.mxu0 0.0
  %871 = vmatprep.subr.mxu0 0.0
  %872 = vmatpush1.msra.mxu0 0.0
  %873 = vmatprep.subr.mxu0 0.0
  %874 = vmatpush1.msra.mxu0 0.0
  %875 = vmatprep.subr.mxu0 0.0
  %876 = vmatpush1.msra.mxu0 0.0
  %877 = vmatprep.subr.mxu0 0.0
  %878 = vmatpush1.msra.mxu0 0.0
  %879 = vmatprep.subr.mxu0 0.0
  %880 = vmatpush1.msra.mxu0 0.0
  %881 = vmatprep.subr.mxu0 0.0
  %882 = vmatpush1.msra.mxu0 0.0
  %883 = vmatprep.subr.mxu0 0.0
  %884 = vmatpush1.msra.mxu0 0.0
  %885 = vmatprep.subr.mxu0 0.0
  %886 = vmatpush1.msra.mxu0 0.0
  %887 = vmatprep.subr.mxu0 0.0
  %888 = vmatpush1.msra.mxu0 0.0
  %889 = vmatprep.subr.mxu0 0.0
  %890 = vmatpush1.msra.mxu0 0.0
  %891 = vmatprep.subr.mxu0 0.0
  %892 = vmatpush1.msra.mxu0 0.0
  %893 = vmatprep.subr.mxu0 0.0
  %894 = vmatpush1.msra.mxu0 0.0
  %895 = vmatprep.subr.mxu0 0.0
  %896 = vmatpush1.msra.mxu0 0.0
  %897 = vmatprep.mubr.f32.mxu0 0.0
  %898 = vmatmul.mubr.f32.gmra.mrb[0].mxu0 %v831
  %v899 = vpop.f32.mrb[0].mxu0
  %v900 = vadd.f32 %v829, %v899
  %v901 = vpop.f32.mrb[0].mxu0
  %902 = vdwg.mxu0
  %v903 = vmul.f32 %v900, 0.5
  %v904 = vtanh.pop %v903
  %v905 = vadd.f32 %v904, 1.0
  %v906 = vmul.f32 %v905, 0.5
  %907 = vst [vmem:[%s11] sm:$0x1] %v906
  // Predicated region
  $region46: #{mlp_forward.1} parent=0 // pred_check
    _
  $region47: #{mlp_forward.1} parent=0 // pred_check_branch
    %909 = sbr.rel (0) target = $region49
  $region48: #{mlp_forward.1} parent=0 // pred_region
    _
  $region49: #{mlp_forward.1} parent=0 // pred_fallthru
    _
  // Predicated region
  $region50: #{mlp_forward.1} parent=0 // pred_check
    _
  $region51: #{mlp_forward.1} parent=0 // pred_check_branch
    %911 = sbr.rel (0) target = $region53
  $region52: #{mlp_forward.1} parent=0 // pred_region
    _
  $region53: #{mlp_forward.1} parent=0 // pred_fallthru
    _

</llo_original>
